<compile_context>
chip_gen: v7x
topology: tpu7x:2x2x1
jax: 0.10.0
libtpu: 0.0.40
codegen_flags: <defaults>
</compile_context>

<pallas_src>
import math

import jax
import jax.numpy as jnp
from jax import lax
from jax.experimental import pallas as pl
from jax.experimental.pallas import tpu as pltpu


def _round_up(x, m):
    return ((x + m - 1) // m) * m


def _pick_tile(n, preferred):
    for t in preferred:
        if t <= n and n % t == 0:
            return t
    return n  # fall back to a single full-dimension block


def _gcn_kernel(x_ref, adj_ref, w_ref, b_ref, o_ref, acc_ref):
    # x_ref:   (tm, F_in)        m-tile of node features
    # adj_ref: (tm, tn)          adj[b, m_tile, n_tile]
    # w_ref:   (F_in, F_out_p)   full (lane-padded) weight, resident across the grid
    # b_ref:   (1, F_out_p)      lane-padded bias row
    # o_ref:   (tn, F_out_p)     output tile for (b, n)
    # acc_ref: (tn, F_in) f32    accumulator for adj^T @ x over the m axis
    m = pl.program_id(2)

    @pl.when(m == 0)
    def _():
        acc_ref[...] = jnp.zeros_like(acc_ref)

    # acc[n, c] += sum_m adj[m, n] * x[m, c]   (== adj_tile^T @ x_tile; K = tm is full)
    # The transpose is expressed via dot_general contraction dims; we cannot just swap
    # adj's block indices in the index_map because adj is not required to be symmetric.
    acc_ref[...] += lax.dot_general(
        adj_ref[...], x_ref[...],
        dimension_numbers=(((0,), (0,)), ((), ())),
        preferred_element_type=jnp.float32,
    )

    @pl.when(m == pl.num_programs(2) - 1)
    def _():
        out = jnp.dot(acc_ref[...], w_ref[...].astype(jnp.float32),
                      preferred_element_type=jnp.float32)
        out = out + b_ref[...]
        o_ref[...] = out.astype(o_ref.dtype)


def graph_convolution(x, adj, weight, bias=None, *,
                      compute_dtype=None, tile_m=None, tile_n=None):
    """Pallas TPU GraphConvolution forward.

    x:      (B, N, F_in)   adj: (B, N, N)   weight: (F_in, F_out)   bias: (F_out,) or None
    returns (B, N, F_out) in x.dtype.
    """
    B, N, F_in = x.shape
    assert adj.shape == (B, N, N)
    F_out = weight.shape[1]
    out_dtype = x.dtype

    # Optional bf16 cast of the big HBM streams (memory-bound on adj); f32 accumulation kept.
    if compute_dtype is not None:
        x = x.astype(compute_dtype)
        adj = adj.astype(compute_dtype)

    if bias is None:
        bias = jnp.zeros((F_out,), jnp.float32)

    # Pad the output/weight lane dimension to a multiple of 128 so output stores are
    # unmasked (lane-dense). MXU cost is unchanged (output columns pad to 128 anyway).
    F_out_p = _round_up(F_out, 128)
    if F_out_p != F_out:
        weight = jnp.pad(weight, ((0, 0), (0, F_out_p - F_out)))
        bias = jnp.pad(bias, (0, F_out_p - F_out))
    weight = weight.astype(jnp.float32)
    bias2d = bias.reshape(1, F_out_p).astype(jnp.float32)

    # Node-dimension tiling: tn is adj's lane dim (multiple of 128, or full N),
    # tm is adj's sublane dim (multiple of 8, or full N). 512x512 f32 adj tiles
    # double-buffered are ~2 MiB -> comfortably within every generation's VMEM budget.
    tm = tile_m if tile_m is not None else _pick_tile(N, (512, 256, 128, 64, 32, 16, 8))
    tn = tile_n if tile_n is not None else _pick_tile(N, (512, 256, 128))
    assert N % tm == 0 and N % tn == 0, "tile sizes must divide N"
    # TODO(synk): N not divisible by 8/128 currently falls back to a single full-N tile;
    # masked edge tiles would be needed for very large ragged N.

    grid = (B, N // tn, N // tm)  # reduction axis (m) last

    kernel = pl.pallas_call(
        _gcn_kernel,
        out_shape=jax.ShapeDtypeStruct((B, N, F_out_p), out_dtype),
        grid_spec=pltpu.PrefetchScalarGridSpec(
            num_scalar_prefetch=0,
            grid=grid,
            in_specs=[
                # Leading batch dim squeezed (None) -> kernel refs are 2-D.
                pl.BlockSpec((None, tm, F_in), lambda b, n, m: (b, m, 0)),
                pl.BlockSpec((None, tm, tn), lambda b, n, m: (b, m, n)),
                pl.BlockSpec((F_in, F_out_p), lambda b, n, m: (0, 0)),
                pl.BlockSpec((1, F_out_p), lambda b, n, m: (0, 0)),
            ],
            out_specs=pl.BlockSpec((None, tn, F_out_p), lambda b, n, m: (b, n, 0)),
            scratch_shapes=[pltpu.VMEM((tn, F_in), jnp.float32)],
        ),
        compiler_params=pltpu.CompilerParams(
            # Two parallel axes (batch, output-node tile) so v7x's dual TensorCores
            # are both fed; the m reduction is 'arbitrary' and last.
            dimension_semantics=("parallel", "parallel", "arbitrary"),
        ),
    )

    out = kernel(x, adj, weight, bias2d)
    if F_out_p != F_out:
        out = out[:, :, :F_out]
    return out


def _reference(x, adj, weight, bias):
    support = jnp.einsum("bnc,cf->bnf", x, weight, precision=lax.Precision.HIGHEST)
    out = jnp.einsum("bmn,bmf->bnf", adj, support, precision=lax.Precision.HIGHEST)
    return out + bias


if __name__ == "__main__":
    # Small shapes consistent with the module: batch=2, nodes=16, in_features=4, out_features=32.
    B, N, F_in, F_out = 2, 16, 4, 32

    key = jax.random.PRNGKey(0)
    kx, kadj, kw, kb = jax.random.split(key, 4)

    # Parameter init mirroring reset_parameters(): U(-stdv, stdv), stdv = 1/sqrt(F_out).
    stdv = 1.0 / math.sqrt(F_out)
    weight = jax.random.uniform(kw, (F_in, F_out), jnp.float32, -stdv, stdv)
    bias = jax.random.uniform(kb, (F_out,), jnp.float32, -stdv, stdv)

    x = jax.random.normal(kx, (B, N, F_in), jnp.float32)
    adj = jax.random.uniform(kadj, (B, N, N), jnp.float32)

    out = jax.block_until_ready(graph_convolution(x, adj, weight, bias))
    ref = _reference(x, adj, weight, bias)
    assert out.shape == (B, N, F_out)
    assert jnp.allclose(out, ref, atol=1e-5, rtol=1e-5), float(jnp.max(jnp.abs(out - ref)))

    # Second run exercising the tiled / multi-step accumulation path (grid = (2, 2, 2)).
    N2 = 256
    kx2, kadj2 = jax.random.split(jax.random.PRNGKey(1), 2)
    x2 = jax.random.normal(kx2, (B, N2, F_in), jnp.float32)
    adj2 = jax.random.uniform(kadj2, (B, N2, N2), jnp.float32)
    out2 = jax.block_until_ready(
        graph_convolution(x2, adj2, weight, bias, tile_m=128, tile_n=128))
    ref2 = _reference(x2, adj2, weight, bias)
    assert out2.shape == (B, N2, F_out)
    assert jnp.allclose(out2, ref2, atol=1e-4, rtol=1e-5), float(jnp.max(jnp.abs(out2 - ref2)))

    print("KERNEL_OK")
</pallas_src>

<mosaic_0001>
module attributes {stable_mosaic.version = 11 : i64} {
  func.func @_gcn_kernel(%arg0: i32, %arg1: i32, %arg2: i32, %arg3: memref<1x16x4xf32, #tpu.memory_space<vmem>>, %arg4: memref<1x16x16xf32, #tpu.memory_space<vmem>>, %arg5: memref<4x128xf32, #tpu.memory_space<vmem>>, %arg6: memref<1x128xf32, #tpu.memory_space<vmem>>, %arg7: memref<1x16x128xf32, #tpu.memory_space<vmem>>, %arg8: memref<16x4xf32, #tpu.memory_space<vmem>>) attributes {dimension_semantics = [#tpu.dimension_semantics<parallel>, #tpu.dimension_semantics<parallel>, #tpu.dimension_semantics<arbitrary>], iteration_bounds = array<i64: 2, 1, 1>, scalar_prefetch = 0 : i64, scratch_operands = 1 : i64, tpu.core_type = #tpu.core_type<tc>, window_params = [{transform_indices = @transform_0, window_bounds = array<i64: 1, 16, 4>}, {transform_indices = @transform_1, window_bounds = array<i64: 1, 16, 16>}, {pipeline_mode = #tpu.pipeline_mode<synchronous>, transform_indices = @transform_2, window_bounds = array<i64: 4, 128>}, {pipeline_mode = #tpu.pipeline_mode<synchronous>, transform_indices = @transform_3, window_bounds = array<i64: 1, 128>}, {transform_indices = @transform_4, window_bounds = array<i64: 1, 16, 128>}]} {
    %c0_i32 = arith.constant 0 : i32
    %0 = arith.cmpi eq, %arg2, %c0_i32 : i32
    %1 = arith.extui %0 : i1 to i32
    %c0_i32_0 = arith.constant 0 : i32
    %2 = arith.cmpi ne, %1, %c0_i32_0 : i32
    scf.if %2 {
      %cst_12 = arith.constant 0.000000e+00 : f32
      %14 = vector.broadcast %cst_12 : f32 to vector<16x4xf32>
      %c0_13 = arith.constant 0 : index
      %c0_14 = arith.constant 0 : index
      %15 = vector.load %arg8[%c0_13, %c0_14] : memref<16x4xf32, #tpu.memory_space<vmem>>, vector<16x4xf32>
      tpu.vector_store %arg8[%c0_13, %c0_14], %14 {strides = array<i32>} : memref<16x4xf32, #tpu.memory_space<vmem>>, vector<16x4xf32>,
    } else {
    }
    %c0 = arith.constant 0 : index
    %c0_1 = arith.constant 0 : index
    %3 = vector.load %arg8[%c0, %c0_1] : memref<16x4xf32, #tpu.memory_space<vmem>>, vector<16x4xf32>
    %c0_2 = arith.constant 0 : index
    %c0_3 = arith.constant 0 : index
    %c0_4 = arith.constant 0 : index
    %4 = vector.load %arg4[%c0_2, %c0_3, %c0_4] : memref<1x16x16xf32, #tpu.memory_space<vmem>>, vector<1x16x16xf32>
    %5 = vector.shape_cast %4 : vector<1x16x16xf32> to vector<16x16xf32>
    %c0_5 = arith.constant 0 : index
    %c0_6 = arith.constant 0 : index
    %c0_7 = arith.constant 0 : index
    %6 = vector.load %arg3[%c0_5, %c0_6, %c0_7] : memref<1x16x4xf32, #tpu.memory_space<vmem>>, vector<1x16x4xf32>
    %7 = vector.shape_cast %6 : vector<1x16x4xf32> to vector<16x4xf32>
    %cst = arith.constant dense<0.000000e+00> : vector<16x4xf32>
    %8 = tpu.matmul %5, %7, %cst {dimension_numbers = #tpu.dot_dimension_numbers<[0], [0], [1], [1], [0, 1, 1, 1], [], []>} : vector<16x16xf32>, vector<16x4xf32>, vector<16x4xf32> -> vector<16x4xf32>
    %9 = arith.addf %3, %8 : vector<16x4xf32>
    %c0_8 = arith.constant 0 : index
    %c0_9 = arith.constant 0 : index
    %10 = vector.load %arg8[%c0_8, %c0_9] : memref<16x4xf32, #tpu.memory_space<vmem>>, vector<16x4xf32>
    tpu.vector_store %arg8[%c0_8, %c0_9], %9 {strides = array<i32>} : memref<16x4xf32, #tpu.memory_space<vmem>>, vector<16x4xf32>,
    %c0_i32_10 = arith.constant 0 : i32
    %11 = arith.cmpi eq, %arg2, %c0_i32_10 : i32
    %12 = arith.extui %11 : i1 to i32
    %c0_i32_11 = arith.constant 0 : i32
    %13 = arith.cmpi ne, %12, %c0_i32_11 : i32
    scf.if %13 {
      %c0_12 = arith.constant 0 : index
      %c0_13 = arith.constant 0 : index
      %14 = vector.load %arg8[%c0_12, %c0_13] : memref<16x4xf32, #tpu.memory_space<vmem>>, vector<16x4xf32>
      %c0_14 = arith.constant 0 : index
      %c0_15 = arith.constant 0 : index
      %15 = vector.load %arg5[%c0_14, %c0_15] : memref<4x128xf32, #tpu.memory_space<vmem>>, vector<4x128xf32>
      %cst_16 = arith.constant dense<0.000000e+00> : vector<16x128xf32>
      %16 = tpu.matmul %14, %15, %cst_16 {dimension_numbers = #tpu.dot_dimension_numbers<[1], [0], [0], [1], [0, 0, 1, 1], [], []>} : vector<16x4xf32>, vector<4x128xf32>, vector<16x128xf32> -> vector<16x128xf32>
      %c0_17 = arith.constant 0 : index
      %c0_18 = arith.constant 0 : index
      %17 = vector.load %arg6[%c0_17, %c0_18] : memref<1x128xf32, #tpu.memory_space<vmem>>, vector<1x128xf32>
      %18 = vector.broadcast %17 : vector<1x128xf32> to vector<16x128xf32>
      %19 = arith.addf %16, %18 : vector<16x128xf32>
      %c0_19 = arith.constant 0 : index
      %c0_20 = arith.constant 0 : index
      %c0_21 = arith.constant 0 : index
      %20 = vector.load %arg7[%c0_19, %c0_20, %c0_21] : memref<1x16x128xf32, #tpu.memory_space<vmem>>, vector<1x16x128xf32>
      %21 = vector.shape_cast %20 : vector<1x16x128xf32> to vector<16x128xf32>
      %22 = vector.shape_cast %19 : vector<16x128xf32> to vector<1x16x128xf32>
      tpu.vector_store %arg7[%c0_19, %c0_20, %c0_21], %22 {strides = array<i32>} : memref<1x16x128xf32, #tpu.memory_space<vmem>>, vector<1x16x128xf32>,
    } else {
    }
    return
  }
  func.func @transform_0(%arg0: i32, %arg1: i32, %arg2: i32) -> (i32, i32, i32) {
    %c0_i32 = arith.constant 0 : i32
    %c0_i32_0 = arith.constant 0 : i32
    return %arg0, %arg2, %c0_i32 : i32, i32, i32
  }
  func.func @transform_1(%arg0: i32, %arg1: i32, %arg2: i32) -> (i32, i32, i32) {
    %c0_i32 = arith.constant 0 : i32
    return %arg0, %arg2, %arg1 : i32, i32, i32
  }
  func.func @transform_2(%arg0: i32, %arg1: i32, %arg2: i32) -> (i32, i32) {
    %c0_i32 = arith.constant 0 : i32
    %c0_i32_0 = arith.constant 0 : i32
    %c0_i32_1 = arith.constant 0 : i32
    return %c0_i32, %c0_i32_0 : i32, i32
  }
  func.func @transform_3(%arg0: i32, %arg1: i32, %arg2: i32) -> (i32, i32) {
    %c0_i32 = arith.constant 0 : i32
    %c0_i32_0 = arith.constant 0 : i32
    %c0_i32_1 = arith.constant 0 : i32
    return %c0_i32, %c0_i32_0 : i32, i32
  }
  func.func @transform_4(%arg0: i32, %arg1: i32, %arg2: i32) -> (i32, i32, i32) {
    %c0_i32 = arith.constant 0 : i32
    %c0_i32_0 = arith.constant 0 : i32
    return %arg0, %arg1, %c0_i32 : i32, i32, i32
  }
}

</mosaic_0001>

<llo_original>
// kernel: tpu_custom_call.1
$region0: #{tpu_custom_call.1}
  #allocation0 [shape = 'u32[]', space=smem, size = 0x4, offset = 0x4, fixed_abs, tag = 'smem constant byte address 0x4 - core index']
  #allocation1 [shape = 'u32[144,128]{1,0:T(1,128)}', space=vmem, size = 0x12000, scoped, tag = 'internal scratch']
  #allocation2 [shape = 'f32[16,4]{1,0:T(8,128)}', space=vmem, size = 0x2000, scoped, tag = 'scratch operand']
  %s0 = inlined_call_operand.vmem [shape: f32[2,16,4], index: 0, kind: input, shape index: {}]
  %s1 = inlined_call_operand.vmem [shape: f32[2,16,16], index: 1, kind: input, shape index: {}]
  %s2 = inlined_call_operand.vmem [shape: f32[4,128], index: 2, kind: input, shape index: {}]
  %s3 = inlined_call_operand.vmem [shape: f32[1,128], index: 3, kind: input, shape index: {}]
  %s4 = inlined_call_operand.hbm [shape: f32[2,16,128], index: 4, kind: output, shape index: {}]
  %s5 = sld [smem:[#allocation0]]
  $region57: #{tpu_custom_call.1} parent=0
    _
  %s7 = ssub.s32 1, %s5
  %s8 = scalar_select 0, %s7, %s5
  $region1: #{tpu_custom_call.1} parent=0
    #allocation3 [shape = 'u8[16384]{0}', space=vmem, size = 0x4000, scoped, tag = 'output window, operand 0']
    #allocation4 [shape = 's32[2]{0}', space=sflag, size = 0x8, scoped, tag = 'scoped memory for tpu_custom_call.1']
    %9 = vsyncpa [#allocation4], 0
    %s10 = scalar_lea.sflag [#allocation4], 1
    %11 = vsyncpa %s10, 0
    loop: start=0, step=1, limit=4
    $region2: #{tpu_custom_call.1} parent=1 // loop_pre_header
      _
    $region3: #{tpu_custom_call.1} parent=1 // loop_header
      %s13 = sphi 0, %s17
      %p14 = scmp.ge.s32.totalorder %s13, 4
      %s20 = sphi 0, %s39
      %s21 = sphi 0, %s35
      %s22 = sphi 0, %s31
      %s23 = sphi 0, %s20
      %s24 = sphi 0, %s21
      %s25 = sphi 0, %s22
      %s26 = sphi 0, %s23
      %s27 = sphi 0, %s24
      %s28 = sphi 0, %s25
      %s44 = sphi 0, %s46
      %s47 = sphi 0, %s44
      %s48 = sphi 0, %s47
      %s64 = sphi 0, %s48
      %s74 = sphi 0, %s76
      %s77 = sphi 0, %s74
      %s78 = sphi 0, %s77
      %s94 = sphi 0, %s78
      %s98 = sphi 0, %s98
      %s100 = sphi 0, %s98
      %s101 = sphi 0, %s100
      %s115 = sphi 0, %s101
      %s119 = sphi 0, %s119
      %s121 = sphi 0, %s119
      %s122 = sphi 0, %s121
      %s136 = sphi 0, %s122
      %s144 = sphi 0, %s146
      %s147 = sphi 0, %s144
      %s148 = sphi 0, %s147
      %s164 = sphi 0, %s148
    $region4: #{tpu_custom_call.1} parent=1 // loop_header_branch
      %16 = sbr.rel (%p14) target = $region8
    $region5: #{tpu_custom_call.1} parent=1 // loop_body
      %s18 = ssub.s32 %s13, 1
      %s19 = ssub.s32 %s13, 2
      %s29 = sadd.s32 1, %s22
      %p30 = scmp.ge.s32.totalorder %s29, 1
      %s31 = scalar_select %p30, 0, %s29
      %s32 = sadd.s32 1, %s21
      %s33 = scalar_select %p30, %s32, %s21
      %p34 = scmp.ge.s32.totalorder %s33, 1
      %s35 = scalar_select %p34, 0, %s33
      %s36 = sadd.s32 1, %s20
      %s37 = scalar_select %p34, %s36, %s20
      %p38 = scmp.ge.s32.totalorder %s37, 2
      %s39 = scalar_select %p38, 0, %s37
      %s40 = ssub.s32 %s20, %s39
      %s41 = ssub.s32 %s22, %s31
      %s42 = sor.u32 %s40, %s41
      %p43 = scmp.eq.s32.totalorder %s42, 0
      %s45 = sadd.s32 %s44, 1
      %s46 = scalar_select %p43, %s44, %s45
      %p49 = pneg %p43
      %p50 = scmp.eq.s32.totalorder %s13, 1
      %p51 = por %p49, %p50
      %p52 = scmp.ne.s32.totalorder %s44, %s47
      %p53 = scmp.eq.s32.totalorder %s13, 0
      %p54 = por %p52, %p53
      %p55 = scmp.ne.s32.totalorder %s44, %s47
      %p56 = scmp.eq.s32.totalorder %s18, 1
      %p57 = por %p55, %p56
      %p58 = scmp.ne.s32.totalorder %s47, %s48
      %p59 = scmp.eq.s32.totalorder %s18, 0
      %p60 = por %p58, %p59
      %p61 = scmp.ne.s32.totalorder %s47, %s48
      %p62 = scmp.eq.s32.totalorder %s19, 1
      %p63 = por %p61, %p62
      %p65 = scmp.ne.s32.totalorder %s48, %s64
      %p66 = scmp.eq.s32.totalorder %s19, 0
      %p67 = por %p65, %p66
      %s68 = ssub.s32 %s20, %s39
      %s69 = ssub.s32 %s22, %s31
      %s70 = sor.u32 %s68, %s69
      %s71 = ssub.s32 %s21, %s35
      %s72 = sor.u32 %s70, %s71
      %p73 = scmp.eq.s32.totalorder %s72, 0
      %s75 = sadd.s32 %s74, 1
      %s76 = scalar_select %p73, %s74, %s75
      %p79 = pneg %p73
      %p80 = scmp.eq.s32.totalorder %s13, 1
      %p81 = por %p79, %p80
      %p82 = scmp.ne.s32.totalorder %s74, %s77
      %p83 = scmp.eq.s32.totalorder %s13, 0
      %p84 = por %p82, %p83
      %p85 = scmp.ne.s32.totalorder %s74, %s77
      %p86 = scmp.eq.s32.totalorder %s18, 1
      %p87 = por %p85, %p86
      %p88 = scmp.ne.s32.totalorder %s77, %s78
      %p89 = scmp.eq.s32.totalorder %s18, 0
      %p90 = por %p88, %p89
      %p91 = scmp.ne.s32.totalorder %s77, %s78
      %p92 = scmp.eq.s32.totalorder %s19, 1
      %p93 = por %p91, %p92
      %p95 = scmp.ne.s32.totalorder %s78, %s94
      %p96 = scmp.eq.s32.totalorder %s19, 0
      %p97 = por %p95, %p96
      %s99 = sadd.s32 %s98, 1
      %p102 = scmp.eq.s32.totalorder %s13, 1
      %p103 = scmp.ne.s32.totalorder %s98, %s100
      %p104 = scmp.eq.s32.totalorder %s13, 0
      %p105 = por %p103, %p104
      %p106 = scmp.ne.s32.totalorder %s98, %s100
      %p107 = scmp.eq.s32.totalorder %s18, 1
      %p108 = por %p106, %p107
      %p109 = scmp.ne.s32.totalorder %s100, %s101
      %p110 = scmp.eq.s32.totalorder %s18, 0
      %p111 = por %p109, %p110
      %p112 = scmp.ne.s32.totalorder %s100, %s101
      %p113 = scmp.eq.s32.totalorder %s19, 1
      %p114 = por %p112, %p113
      %p116 = scmp.ne.s32.totalorder %s101, %s115
      %p117 = scmp.eq.s32.totalorder %s19, 0
      %p118 = por %p116, %p117
      %s120 = sadd.s32 %s119, 1
      %p123 = scmp.eq.s32.totalorder %s13, 1
      %p124 = scmp.ne.s32.totalorder %s119, %s121
      %p125 = scmp.eq.s32.totalorder %s13, 0
      %p126 = por %p124, %p125
      %p127 = scmp.ne.s32.totalorder %s119, %s121
      %p128 = scmp.eq.s32.totalorder %s18, 1
      %p129 = por %p127, %p128
      %p130 = scmp.ne.s32.totalorder %s121, %s122
      %p131 = scmp.eq.s32.totalorder %s18, 0
      %p132 = por %p130, %p131
      %p133 = scmp.ne.s32.totalorder %s121, %s122
      %p134 = scmp.eq.s32.totalorder %s19, 1
      %p135 = por %p133, %p134
      %p137 = scmp.ne.s32.totalorder %s122, %s136
      %p138 = scmp.eq.s32.totalorder %s19, 0
      %p139 = por %p137, %p138
      %s140 = ssub.s32 %s20, %s39
      %s141 = ssub.s32 %s21, %s35
      %s142 = sor.u32 %s140, %s141
      %p143 = scmp.eq.s32.totalorder %s142, 0
      %s145 = sadd.s32 %s144, 1
      %s146 = scalar_select %p143, %s144, %s145
      %p149 = pneg %p143
      %p150 = scmp.eq.s32.totalorder %s13, 1
      %p151 = por %p149, %p150
      %p152 = scmp.ne.s32.totalorder %s144, %s147
      %p153 = scmp.eq.s32.totalorder %s13, 0
      %p154 = por %p152, %p153
      %p155 = scmp.ne.s32.totalorder %s144, %s147
      %p156 = scmp.eq.s32.totalorder %s18, 1
      %p157 = por %p155, %p156
      %p158 = scmp.ne.s32.totalorder %s147, %s148
      %p159 = scmp.eq.s32.totalorder %s18, 0
      %p160 = por %p158, %p159
      %p161 = scmp.ne.s32.totalorder %s147, %s148
      %p162 = scmp.eq.s32.totalorder %s19, 1
      %p163 = por %p161, %p162
      %p165 = scmp.ne.s32.totalorder %s148, %s164
      %p166 = scmp.eq.s32.totalorder %s19, 0
      %p167 = por %p165, %p166
      %p168 = scmp.le.s32.totalorder 1, %s13
      %p169 = scmp.lt.s32.totalorder %s13, 3
      %p170 = pnand %p168, %p169
      %p171 = pneg %p170
      // Predicated region
      $region9: #{tpu_custom_call.1} parent=5 // pred_check
        _
      $region10: #{tpu_custom_call.1} parent=5 // pred_check_branch
        %173 = sbr.rel (%p170) target = $region12
      $region11: #{tpu_custom_call.1} parent=5 // pred_region
        %s174 = ssub.s32 %s13, 1
        // Predicated region
        $region13: #{tpu_custom_call.1} parent=11 // pred_check
          %p175 = pneg %p111
        $region14: #{tpu_custom_call.1} parent=11 // pred_check_branch
          %177 = sbr.rel (%p175) target = $region16
        $region15: #{tpu_custom_call.1} parent=11 // pred_region
          _
        $region16: #{tpu_custom_call.1} parent=11 // pred_fallthru
          _
        // Predicated region
        $region17: #{tpu_custom_call.1} parent=11 // pred_check
          %p178 = pneg %p132
        $region18: #{tpu_custom_call.1} parent=11 // pred_check_branch
          %180 = sbr.rel (%p178) target = $region20
        $region19: #{tpu_custom_call.1} parent=11 // pred_region
          _
        $region20: #{tpu_custom_call.1} parent=11 // pred_fallthru
          _
      $region12: #{tpu_custom_call.1} parent=5 // pred_fallthru
        _
      %p181 = scmp.lt.s32.totalorder %s13, 2
      // Predicated region
      $region21: #{tpu_custom_call.1} parent=5 // pred_check
        %p182 = pneg %p181
      $region22: #{tpu_custom_call.1} parent=5 // pred_check_branch
        %184 = sbr.rel (%p182) target = $region24
      $region23: #{tpu_custom_call.1} parent=5 // pred_region
        // Predicated region
        $region25: #{tpu_custom_call.1} parent=23 // pred_check
          %p185 = pneg %p54
        $region26: #{tpu_custom_call.1} parent=23 // pred_check_branch
          %187 = sbr.rel (%p185) target = $region28
        $region27: #{tpu_custom_call.1} parent=23 // pred_region
          %s188 = smul.u32 2, %s22
          %p189 = scmp.lt.s32.totalorder %s20, 1
          %s190 = scalar_select %p189, %s20, 1
          %p191 = scmp.lt.s32.totalorder %s188, 1
          %s192 = scalar_select %p191, %s188, 1
          %s193 = smul.addr %s190, 2
          %s194 = sadd.s32 %s192, %s193
          %s195 = smul.addr %s194, 8
          %s196 = scalar_lea.vmem %s0, %s195
          %s197 = smul.u32 2, %s22
        $region28: #{tpu_custom_call.1} parent=23 // pred_fallthru
          _
        // Predicated region
        $region29: #{tpu_custom_call.1} parent=23 // pred_check
          %p198 = pneg %p84
        $region30: #{tpu_custom_call.1} parent=23 // pred_check_branch
          %200 = sbr.rel (%p198) target = $region32
        $region31: #{tpu_custom_call.1} parent=23 // pred_region
          %s201 = smul.u32 2, %s22
          %p202 = scmp.lt.s32.totalorder %s20, 1
          %s203 = scalar_select %p202, %s20, 1
          %p204 = scmp.lt.s32.totalorder %s201, 1
          %s205 = scalar_select %p204, %s201, 1
          %p206 = scmp.lt.s32.totalorder %s21, 0
          %s207 = scalar_select %p206, %s21, 0
          %s208 = sadd.s32 %s207, %s205
          %s209 = smul.addr %s203, 2
          %s210 = sadd.s32 %s208, %s209
          %s211 = smul.addr %s210, 8
          %s212 = scalar_lea.vmem %s1, %s211
          %s213 = smul.u32 2, %s22
        $region32: #{tpu_custom_call.1} parent=23 // pred_fallthru
          _
      $region24: #{tpu_custom_call.1} parent=5 // pred_fallthru
        _
      %p214 = scmp.le.s32.totalorder 1, %s13
      %p215 = scmp.lt.s32.totalorder %s13, 3
      %p216 = pnand %p214, %p215
      %p217 = pneg %p216
      // Predicated region
      $region33: #{tpu_custom_call.1} parent=5 // pred_check
        _
      $region34: #{tpu_custom_call.1} parent=5 // pred_check_branch
        %219 = sbr.rel (%p216) target = $region36
      $region35: #{tpu_custom_call.1} parent=5 // pred_region
        %s220 = ssub.s32 %s13, 1
        %s221 = smul.u32 2, %s25
        %p222 = scmp.lt.s32.totalorder %s23, 1
        %s223 = scalar_select %p222, %s23, 1
        %p224 = scmp.lt.s32.totalorder %s221, 1
        %s225 = scalar_select %p224, %s221, 1
        %s226 = smul.addr %s223, 2
        %s227 = sadd.s32 %s225, %s226
        %s228 = smul.addr %s227, 8
        %s229 = scalar_lea.vmem %s0, %s228
        %p230 = pneg %p60
        %p231 = pneg %p57
        %s232 = smul.u32 2, %s25
        %p233 = scmp.lt.s32.totalorder %s23, 1
        %s234 = scalar_select %p233, %s23, 1
        %p235 = scmp.lt.s32.totalorder %s232, 1
        %s236 = scalar_select %p235, %s232, 1
        %p237 = scmp.lt.s32.totalorder %s24, 0
        %s238 = scalar_select %p237, %s24, 0
        %s239 = sadd.s32 %s238, %s236
        %s240 = smul.addr %s234, 2
        %s241 = sadd.s32 %s239, %s240
        %s242 = smul.addr %s241, 8
        %s243 = scalar_lea.vmem %s1, %s242
        %p244 = pneg %p90
        %p245 = pneg %p87
        %p246 = pneg %p111
        %p247 = pneg %p108
        %p248 = pneg %p132
        %p249 = pneg %p129
        %p250 = pneg %p160
        %p251 = pneg %p157
        %s252 = sand.u32 %s147, 1
        %s253 = scalar_lea.sflag [#allocation4], %s252
        %s254 = sand.u32 %s147, 1
        %s255 = smul.addr %s254, 16
        %s256 = scalar_lea.vmem [#allocation3], %s255
        %s257 = smul.u32 2, %s25
        %p258 = scmp.lt.s32.totalorder %s23, 1
        %s259 = scalar_select %p258, %s23, 1
        %p260 = scmp.lt.s32.totalorder %s257, 1
        %s261 = scalar_select %p260, %s257, 1
        %s262 = smul.addr %s259, 2
        %s263 = sadd.s32 %s261, %s262
        %s264 = smul.addr %s263, 8
        %s265 = scalar_lea.vmem %s0, %s264
        %s266 = smul.u32 2, %s25
        %s267 = smul.u32 2, %s25
        %p268 = scmp.lt.s32.totalorder %s23, 1
        %s269 = scalar_select %p268, %s23, 1
        %p270 = scmp.lt.s32.totalorder %s267, 1
        %s271 = scalar_select %p270, %s267, 1
        %p272 = scmp.lt.s32.totalorder %s24, 0
        %s273 = scalar_select %p272, %s24, 0
        %s274 = sadd.s32 %s273, %s271
        %s275 = smul.addr %s269, 2
        %s276 = sadd.s32 %s274, %s275
        %s277 = smul.addr %s276, 8
        %s278 = scalar_lea.vmem %s1, %s277
        %s279 = smul.u32 2, %s25
        %s280 = smul.u32 2, %s24
        %p281 = scmp.eq.s32.totalorder %s25, 0
        // Predicated region
        $region37: #{tpu_custom_call.1} parent=35 // pred_check
          %p282 = pneg %p281
        $region38: #{tpu_custom_call.1} parent=35 // pred_check_branch
          %284 = sbr.rel (%p282) target = $region40
        $region39: #{tpu_custom_call.1} parent=35 // pred_region
          %vm285 = vcmask 31744
          %286 = vst.msk [vmem:[#allocation2] sm:$0xff] %vm285, 0.0
          %287 = vst.msk [vmem:[#allocation2 + $0x8] sm:$0xff] %vm285, 0.0
        $region40: #{tpu_custom_call.1} parent=35 // pred_fallthru
          _
        %v288 = vld [vmem:[#allocation2] sm:$0xff]
        %v289 = vld [vmem:[#allocation2 + $0x8] sm:$0xff]
        %v290 = vld [vmem:[%s278] sm:$0xff]
        %v291 = vld [vmem:[%s278 + $0x8] sm:$0xff]
        %v292 = vld [vmem:[%s265] sm:$0xff]
        %v293 = vld [vmem:[%s265 + $0x8] sm:$0xff]
        %294 = vxpose.xlu0.b32.start [1/16] %v290, 128
        %295 = vxpose.xlu0.b32.cont [2/16] %v291, 128
        %296 = vxpose.xlu0.b32.cont [3/16] 0.0, 128
        %297 = vxpose.xlu0.b32.cont [4/16] 0.0, 128
        %298 = vxpose.xlu0.b32.cont [5/16] 0.0, 128
        %299 = vxpose.xlu0.b32.cont [6/16] 0.0, 128
        %300 = vxpose.xlu0.b32.cont [7/16] 0.0, 128
        %301 = vxpose.xlu0.b32.cont [8/16] 0.0, 128
        %302 = vxpose.xlu0.b32.cont [9/16] 0.0, 128
        %303 = vxpose.xlu0.b32.cont [10/16] 0.0, 128
        %304 = vxpose.xlu0.b32.cont [11/16] 0.0, 128
        %305 = vxpose.xlu0.b32.cont [12/16] 0.0, 128
        %306 = vxpose.xlu0.b32.cont [13/16] 0.0, 128
        %307 = vxpose.xlu0.b32.cont [14/16] 0.0, 128
        %308 = vxpose.xlu0.b32.cont [15/16] 0.0, 128
        %309 = vxpose.xlu0.b32.end [16/16] 0.0, 128
        %v310 = vpop.trf.xlu0
        %v311 = vpop.trf.xlu0
        %v312 = vpop.trf.xlu0
        %v313 = vpop.trf.xlu0
        %v314 = vpop.trf.xlu0
        %v315 = vpop.trf.xlu0
        %v316 = vpop.trf.xlu0
        %v317 = vpop.trf.xlu0
        %v318 = vpop.trf.xlu0
        %v319 = vpop.trf.xlu0
        %v320 = vpop.trf.xlu0
        %v321 = vpop.trf.xlu0
        %v322 = vpop.trf.xlu0
        %v323 = vpop.trf.xlu0
        %v324 = vpop.trf.xlu0
        %v325 = vpop.trf.xlu0
        %vm326 = vcmask 130048
        %v328 = vsel %vm326, %v310, 0
        %v331 = vsel %vm326, %v311, 0
        %333 = vmatprep.subr.mxu0 0.0
        %334 = vmatpush1.msra.mxu0 %v292
        %335 = vmatprep.subr.mxu0 0.0
        %336 = vmatpush1.msra.mxu0 %v293
        %337 = vmatprep.subr.mxu0 0.0
        %338 = vmatpush1.msra.mxu0 0.0
        %339 = vmatprep.subr.mxu0 0.0
        %340 = vmatpush1.msra.mxu0 0.0
        %341 = vmatprep.subr.mxu0 0.0
        %342 = vmatpush1.msra.mxu0 0.0
        %343 = vmatprep.subr.mxu0 0.0
        %344 = vmatpush1.msra.mxu0 0.0
        %345 = vmatprep.subr.mxu0 0.0
        %346 = vmatpush1.msra.mxu0 0.0
        %347 = vmatprep.subr.mxu0 0.0
        %348 = vmatpush1.msra.mxu0 0.0
        %349 = vmatprep.subr.mxu0 0.0
        %350 = vmatpush1.msra.mxu0 0.0
        %351 = vmatprep.subr.mxu0 0.0
        %352 = vmatpush1.msra.mxu0 0.0
        %353 = vmatprep.subr.mxu0 0.0
        %354 = vmatpush1.msra.mxu0 0.0
        %355 = vmatprep.subr.mxu0 0.0
        %356 = vmatpush1.msra.mxu0 0.0
        %357 = vmatprep.subr.mxu0 0.0
        %358 = vmatpush1.msra.mxu0 0.0
        %359 = vmatprep.subr.mxu0 0.0
        %360 = vmatpush1.msra.mxu0 0.0
        %361 = vmatprep.subr.mxu0 0.0
        %362 = vmatpush1.msra.mxu0 0.0
        %363 = vmatprep.subr.mxu0 0.0
        %364 = vmatpush1.msra.mxu0 0.0
        %365 = vmatprep.subr.mxu0 0.0
        %366 = vmatpush1.msra.mxu0 0.0
        %367 = vmatprep.subr.mxu0 0.0
        %368 = vmatpush1.msra.mxu0 0.0
        %369 = vmatprep.subr.mxu0 0.0
        %370 = vmatpush1.msra.mxu0 0.0
        %371 = vmatprep.subr.mxu0 0.0
        %372 = vmatpush1.msra.mxu0 0.0
        %373 = vmatprep.subr.mxu0 0.0
        %374 = vmatpush1.msra.mxu0 0.0
        %375 = vmatprep.subr.mxu0 0.0
        %376 = vmatpush1.msra.mxu0 0.0
        %377 = vmatprep.subr.mxu0 0.0
        %378 = vmatpush1.msra.mxu0 0.0
        %379 = vmatprep.subr.mxu0 0.0
        %380 = vmatpush1.msra.mxu0 0.0
        %381 = vmatprep.subr.mxu0 0.0
        %382 = vmatpush1.msra.mxu0 0.0
        %383 = vmatprep.subr.mxu0 0.0
        %384 = vmatpush1.msra.mxu0 0.0
        %385 = vmatprep.subr.mxu0 0.0
        %386 = vmatpush1.msra.mxu0 0.0
        %387 = vmatprep.subr.mxu0 0.0
        %388 = vmatpush1.msra.mxu0 0.0
        %389 = vmatprep.subr.mxu0 0.0
        %390 = vmatpush1.msra.mxu0 0.0
        %391 = vmatprep.subr.mxu0 0.0
        %392 = vmatpush1.msra.mxu0 0.0
        %393 = vmatprep.subr.mxu0 0.0
        %394 = vmatpush1.msra.mxu0 0.0
        %395 = vmatprep.subr.mxu0 0.0
        %396 = vmatpush1.msra.mxu0 0.0
        %397 = vmatprep.mubr.f32.mxu0 0.0
        %398 = vmatmul.mubr.f32.gmra.mrb[0].mxu0 %v328
        %v399 = vpop.f32.mrb[0].mxu0
        %v400 = vadd.f32 0.0, %v399
        %v401 = vpop.f32.mrb[0].mxu0
        %402 = vmatprep.mubr.f32.mxu0 0.0
        %403 = vmatmul.mubr.f32.gmra.mrb[0].mxu0 %v331
        %v404 = vpop.f32.mrb[0].mxu0
        %v405 = vadd.f32 0.0, %v404
        %v406 = vpop.f32.mrb[0].mxu0
        %407 = vdwg.mxu0
        %v408 = vadd.f32 %v288, %v400
        %v409 = vadd.f32 %v289, %v405
        %vm410 = vcmask 31744
        %411 = vst.msk [vmem:[#allocation2] sm:$0xff] %vm410, %v408
        %412 = vst.msk [vmem:[#allocation2 + $0x8] sm:$0xff] %vm410, %v409
        // Predicated region
        $region41: #{tpu_custom_call.1} parent=35 // pred_check
          %p413 = pneg %p281
        $region42: #{tpu_custom_call.1} parent=35 // pred_check_branch
          %415 = sbr.rel (%p413) target = $region44
        $region43: #{tpu_custom_call.1} parent=35 // pred_region
          %v416 = vld [vmem:[#allocation2] sm:$0xff]
          %v417 = vld [vmem:[#allocation2 + $0x8] sm:$0xff]
          %v418 = vld [vmem:[%s2] sm:$0xf]
          %v419 = vld [vmem:[%s3] sm:$0x1]
          %v421 = vlaneseq
          %v422 = vshrl.u32 %v421, 7
          %v423 = vsub.s32 0, %v422
          %v424 = vrot.slane %v419, %v423
          %v427 = vsel %vm410, %v416, 0
          %v430 = vsel %vm410, %v417, 0
          %vm432 = vcmask 1043456
          %v434 = vsel %vm432, %v418, 0
          %436 = vmatprep.subr.mxu0 0.0
          %437 = vmatpush1.msra.mxu0 %v434
          %438 = vmatprep.subr.mxu0 0.0
          %439 = vmatpush1.msra.mxu0 0.0
          %440 = vmatprep.subr.mxu0 0.0
          %441 = vmatpush1.msra.mxu0 0.0
          %442 = vmatprep.subr.mxu0 0.0
          %443 = vmatpush1.msra.mxu0 0.0
          %444 = vmatprep.subr.mxu0 0.0
          %445 = vmatpush1.msra.mxu0 0.0
          %446 = vmatprep.subr.mxu0 0.0
          %447 = vmatpush1.msra.mxu0 0.0
          %448 = vmatprep.subr.mxu0 0.0
          %449 = vmatpush1.msra.mxu0 0.0
          %450 = vmatprep.subr.mxu0 0.0
          %451 = vmatpush1.msra.mxu0 0.0
          %452 = vmatprep.subr.mxu0 0.0
          %453 = vmatpush1.msra.mxu0 0.0
          %454 = vmatprep.subr.mxu0 0.0
          %455 = vmatpush1.msra.mxu0 0.0
          %456 = vmatprep.subr.mxu0 0.0
          %457 = vmatpush1.msra.mxu0 0.0
          %458 = vmatprep.subr.mxu0 0.0
          %459 = vmatpush1.msra.mxu0 0.0
          %460 = vmatprep.subr.mxu0 0.0
          %461 = vmatpush1.msra.mxu0 0.0
          %462 = vmatprep.subr.mxu0 0.0
          %463 = vmatpush1.msra.mxu0 0.0
          %464 = vmatprep.subr.mxu0 0.0
          %465 = vmatpush1.msra.mxu0 0.0
          %466 = vmatprep.subr.mxu0 0.0
          %467 = vmatpush1.msra.mxu0 0.0
          %468 = vmatprep.subr.mxu0 0.0
          %469 = vmatpush1.msra.mxu0 0.0
          %470 = vmatprep.subr.mxu0 0.0
          %471 = vmatpush1.msra.mxu0 0.0
          %472 = vmatprep.subr.mxu0 0.0
          %473 = vmatpush1.msra.mxu0 0.0
          %474 = vmatprep.subr.mxu0 0.0
          %475 = vmatpush1.msra.mxu0 0.0
          %476 = vmatprep.subr.mxu0 0.0
          %477 = vmatpush1.msra.mxu0 0.0
          %478 = vmatprep.subr.mxu0 0.0
          %479 = vmatpush1.msra.mxu0 0.0
          %480 = vmatprep.subr.mxu0 0.0
          %481 = vmatpush1.msra.mxu0 0.0
          %482 = vmatprep.subr.mxu0 0.0
          %483 = vmatpush1.msra.mxu0 0.0
          %484 = vmatprep.subr.mxu0 0.0
          %485 = vmatpush1.msra.mxu0 0.0
          %486 = vmatprep.subr.mxu0 0.0
          %487 = vmatpush1.msra.mxu0 0.0
          %488 = vmatprep.subr.mxu0 0.0
          %489 = vmatpush1.msra.mxu0 0.0
          %490 = vmatprep.subr.mxu0 0.0
          %491 = vmatpush1.msra.mxu0 0.0
          %492 = vmatprep.subr.mxu0 0.0
          %493 = vmatpush1.msra.mxu0 0.0
          %494 = vmatprep.subr.mxu0 0.0
          %495 = vmatpush1.msra.mxu0 0.0
          %496 = vmatprep.subr.mxu0 0.0
          %497 = vmatpush1.msra.mxu0 0.0
          %498 = vmatprep.subr.mxu0 0.0
          %499 = vmatpush1.msra.mxu0 0.0
          %500 = vmatprep.mubr.f32.mxu0 0.0
          %501 = vmatmul.mubr.f32.gmra.mrb[0].mxu0 %v427
          %v502 = vpop.f32.mrb[0].mxu0
          %v503 = vadd.f32 %v424, %v502
          %v504 = vpop.f32.mrb[0].mxu0
          %505 = vmatprep.mubr.f32.mxu0 0.0
          %506 = vmatmul.mubr.f32.gmra.mrb[0].mxu0 %v430
          %v507 = vpop.f32.mrb[0].mxu0
          %v508 = vadd.f32 %v424, %v507
          %v509 = vpop.f32.mrb[0].mxu0
          %510 = vdwg.mxu0
          %511 = vst [vmem:[%s256] sm:$0xff] %v503
          %512 = vst [vmem:[%s256 + $0x8] sm:$0xff] %v508
        $region44: #{tpu_custom_call.1} parent=35 // pred_fallthru
          _
        %s513 = sand.u32 %s147, 1
        %s514 = scalar_lea.sflag [#allocation4], %s513
        %s515 = sand.u32 %s147, 1
        %s516 = smul.addr %s515, 16
        %s517 = scalar_lea.vmem [#allocation3], %s516
        // Predicated region
        $region45: #{tpu_custom_call.1} parent=35 // pred_check
          %p518 = pneg %p157
        $region46: #{tpu_custom_call.1} parent=35 // pred_check_branch
          %520 = sbr.rel (%p518) target = $region48
        $region47: #{tpu_custom_call.1} parent=35 // pred_region
          %s521 = smul.u32 2, %s24
          %s523 = ssub.s32 256, 256
          %524 = vsyncadd %s514, %s523
          %s525 = smul.addr %s23, 2
          %s526 = sadd.s32 %s521, %s525
          %s527 = smul.addr %s526, 128
          %s528 = scalar_lea.hbm %s4, %s527
          %s529 = sshll.u32 %s517, 4
          %s530 = int_to_ptr.vmem [resolvable:$true] %s529
          %535 = dma.vmem_to_hbm [thread:$0]  %s530, 256, %s528, %s514, 128, 128, 8
        $region48: #{tpu_custom_call.1} parent=35 // pred_fallthru
          _
      $region36: #{tpu_custom_call.1} parent=5 // pred_fallthru
        _
      %p536 = scmp.le.s32.totalorder 2, %s13
      // Predicated region
      $region49: #{tpu_custom_call.1} parent=5 // pred_check
        %p537 = pneg %p536
      $region50: #{tpu_custom_call.1} parent=5 // pred_check_branch
        %539 = sbr.rel (%p537) target = $region52
      $region51: #{tpu_custom_call.1} parent=5 // pred_region
        %s540 = ssub.s32 %s13, 2
        // Predicated region
        $region53: #{tpu_custom_call.1} parent=51 // pred_check
          %p541 = pneg %p163
        $region54: #{tpu_custom_call.1} parent=51 // pred_check_branch
          %543 = sbr.rel (%p541) target = $region56
        $region55: #{tpu_custom_call.1} parent=51 // pred_region
          %s544 = sand.u32 %s148, 1
          %s545 = scalar_lea.sflag [#allocation4], %s544
          %s546 = sand.u32 %s148, 1
          %s547 = smul.addr %s546, 16
          %s548 = scalar_lea.vmem [#allocation3], %s547
          %549 = dma.done %s545, 256
        $region56: #{tpu_custom_call.1} parent=51 // pred_fallthru
          _
      $region52: #{tpu_custom_call.1} parent=5 // pred_fallthru
        _
    $region6: #{tpu_custom_call.1} parent=1 // loop_footer
      %s17 = sadd.s32 1, %s13
    $region7: #{tpu_custom_call.1} parent=1 // loop_footer_branch
      %12 = sbr.rel target = $region3
    $region8: #{tpu_custom_call.1} parent=1 // loop_exit
      _
    %550 = vsyncpa [#allocation4], 1
    %s551 = scalar_lea.sflag [#allocation4], 1
    %552 = vsyncpa %s551, 1

</llo_original>
